<compile_context>
chip_gen: v5e
topology: v5e:2x2
jax: 0.10.0
libtpu: 0.0.40
codegen_flags: <defaults>
</compile_context>

<pallas_src>
import functools

import jax
import jax.numpy as jnp
from jax.experimental import pallas as pl
from jax.experimental.pallas import tpu as pltpu

LANE = 128


def _round_up(n, m):
    return ((n + m - 1) // m) * m


def _min_sublane(dtype):
    # 4-byte -> 8 rows, 2-byte -> 16 rows, 1-byte -> 32 rows.
    itemsize = jnp.dtype(dtype).itemsize
    return 8 * max(1, 4 // itemsize)


def dnn3_kernel(x_ref,
                w1_ref, b1_ref,
                w2_ref, b2_ref,
                w3_ref, b3_ref,
                w4_ref, b4_ref,
                o_ref):
    """Fused 4-layer MLP for one batch tile.  Weights stay VMEM-resident.

    Matmuls accumulate in f32 on the MXU; the input cast, bias-add and ReLU
    run on the VPU (free filler under the MXU slot)."""
    cdt = w1_ref.dtype                       # compute dtype (f32 or bf16)
    x = x_ref[...].astype(cdt)               # in-kernel cast (no-op for f32)

    # layer 1: Linear(in_dim, 256) + ReLU
    h = jnp.dot(x, w1_ref[...], preferred_element_type=jnp.float32) + b1_ref[...]
    h = jnp.maximum(h, 0.0).astype(cdt)

    # layer 2: Linear(256, 128) + ReLU
    h = jnp.dot(h, w2_ref[...], preferred_element_type=jnp.float32) + b2_ref[...]
    h = jnp.maximum(h, 0.0).astype(cdt)

    # layer 3: Linear(128, 128) + ReLU
    h = jnp.dot(h, w3_ref[...], preferred_element_type=jnp.float32) + b3_ref[...]
    h = jnp.maximum(h, 0.0).astype(cdt)

    # layer 4: Linear(128, out_dim), no activation
    h = jnp.dot(h, w4_ref[...], preferred_element_type=jnp.float32) + b4_ref[...]
    o_ref[...] = h.astype(o_ref.dtype)


def prepare_params(params, compute_dtype=jnp.float32):
    """One-time weight cast (hoisted out of the per-call path).

    Weights are stored [in_features, out_features]; biases stay f32 because
    the bias-add happens on the f32 MXU accumulator.  bf16 compute is a good
    default on v5e / v6e / v7x (all have bf16-native MXUs); f32 accumulation
    preserves accuracy.
    """
    out = []
    for i in range(1, 5):
        out.append(params[f"w{i}"].astype(compute_dtype))
        out.append(params[f"b{i}"].reshape(1, -1).astype(jnp.float32))
    return tuple(out)


def dnn3_forward(x, prepared, *, tile_b=1024, out_dtype=None):
    """x: [B, in_dim] (any float dtype).  prepared: output of prepare_params.

    out_dtype defaults to x.dtype; pass jnp.bfloat16 to halve writeback bytes
    when downstream accepts bf16.
    """
    B, in_dim = x.shape
    w1, b1, w2, b2, w3, b3, w4, b4 = prepared
    assert w1.shape[0] == in_dim, "w1 must stay [in_dim, 256] (unpadded K)"
    out_dim = w4.shape[1]
    compute_dtype = w1.dtype
    out_dtype = x.dtype if out_dtype is None else out_dtype

    # --- batch tiling ---------------------------------------------------
    # Sublane granularity: 16-row multiples if any streamed/compute dtype is
    # 16-bit (bf16 packs 2 rows/sublane), else 8.
    sub = max(_min_sublane(x.dtype), _min_sublane(compute_dtype),
              _min_sublane(out_dtype))
    b_rounded = _round_up(B, sub)
    tile_b = _round_up(min(max(int(tile_b), sub), b_rounded), sub)
    # v7x has 2 TensorCores: make sure a "whole batch in one step" grid is
    # split into (at least) 2 parallel steps when the batch can be split.
    if tile_b >= b_rounded and b_rounded >= 2 * sub:
        tile_b = _round_up((b_rounded + 1) // 2, sub)
    b_pad = _round_up(B, tile_b)
    grid = (b_pad // tile_b,)

    # Pad only the batch dim, and only when ragged (no feature-dim padding,
    # no wrapper-side dtype cast).
    x_p = jnp.pad(x, ((0, b_pad - B), (0, 0))) if b_pad != B else x

    def resident(arr):
        # Constant index_map: same block every grid step -> stays VMEM
        # resident, no re-issued DMA per step.
        return pl.BlockSpec(arr.shape, lambda i: (0, 0))

    in_specs = [
        pl.BlockSpec((tile_b, in_dim), lambda i: (i, 0)),   # x: streamed
        resident(w1), resident(b1),
        resident(w2), resident(b2),
        resident(w3), resident(b3),
        resident(w4), resident(b4),
    ]
    out_specs = pl.BlockSpec((tile_b, out_dim), lambda i: (i, 0))

    # --- cost estimate + VMEM budgeting ----------------------------------
    flops = 2 * b_pad * (in_dim * 256 + 256 * 128 + 128 * 128 + 128 * out_dim)
    weight_bytes = sum(int(a.size) * a.dtype.itemsize for a in prepared)
    bytes_accessed = (int(x_p.size) * x_p.dtype.itemsize
                      + weight_bytes
                      + b_pad * out_dim * jnp.dtype(out_dtype).itemsize)
    cost = pl.CostEstimate(flops=flops, transcendentals=0,
                           bytes_accessed=bytes_accessed)

    vmem_est = (2 * tile_b * in_dim * x_p.dtype.itemsize          # x (dbl buf)
                + 2 * tile_b * out_dim * jnp.dtype(out_dtype).itemsize
                + 2 * weight_bytes                                 # resident
                + 4 * tile_b * 256 * 4)                            # f32 acts
    cp_kwargs = dict(dimension_semantics=("parallel",))
    if vmem_est > (24 << 20):
        # Explicit scoped-VMEM limit with headroom (capped at v7x physical).
        cp_kwargs["vmem_limit_bytes"] = int(min(vmem_est * 3 // 2, 64 << 20))

    out = pl.pallas_call(
        dnn3_kernel,
        out_shape=jax.ShapeDtypeStruct((b_pad, out_dim), out_dtype),
        grid_spec=pl.GridSpec(grid=grid, in_specs=in_specs, out_specs=out_specs),
        compiler_params=pltpu.CompilerParams(**cp_kwargs),
        cost_estimate=cost,
    )(x_p, w1, b1, w2, b2, w3, b3, w4, b4)

    return out[:B] if b_pad != B else out


def init_params(key, inputs, outputs):
    """Deterministic init matching torch.nn.Linear default U(+-1/sqrt(fan_in)).
    Weights stored as [in_features, out_features] (transpose of torch layout)."""
    dims = [(inputs, 256), (256, 128), (128, 128), (128, outputs)]
    params = {}
    for idx, (fan_in, fan_out) in enumerate(dims, start=1):
        key, kw, kb = jax.random.split(key, 3)
        bound = 1.0 / jnp.sqrt(jnp.float32(fan_in))
        params[f"w{idx}"] = jax.random.uniform(
            kw, (fan_in, fan_out), jnp.float32, -bound, bound)
        params[f"b{idx}"] = jax.random.uniform(
            kb, (1, fan_out), jnp.float32, -bound, bound)
    return params


def dnn3_reference(x, params):
    h = jnp.maximum(x @ params["w1"] + params["b1"], 0.0)
    h = jnp.maximum(h @ params["w2"] + params["b2"], 0.0)
    h = jnp.maximum(h @ params["w3"] + params["b3"], 0.0)
    return h @ params["w4"] + params["b4"]


if __name__ == "__main__":
    B, INPUTS, OUTPUTS = 16, 32, 16

    key = jax.random.PRNGKey(0)
    key, kx = jax.random.split(key)
    x = jax.random.normal(kx, (B, INPUTS), jnp.float32)
    params = init_params(key, INPUTS, OUTPUTS)
    ref = dnn3_reference(x, params)

    # Hoisted one-time param preparation (no per-call pad/cast passes).
    prepared_f32 = prepare_params(params, jnp.float32)
    prepared_bf16 = prepare_params(params, jnp.bfloat16)

    # 1) f32 path.  Small batch auto-splits into 2 grid steps (2 TCs on v7x).
    out = jax.block_until_ready(dnn3_forward(x, prepared_f32))
    assert out.shape == (B, OUTPUTS)
    assert jnp.allclose(out, ref, atol=1e-4, rtol=1e-4), "f32 mismatch vs reference"

    # 2) Ragged batch + multi-step grid (B=40, tile_b=16 -> padded to 48, grid=3).
    x2 = jax.random.normal(jax.random.PRNGKey(1), (40, INPUTS), jnp.float32)
    out2 = jax.block_until_ready(dnn3_forward(x2, prepared_f32, tile_b=16))
    ref2 = dnn3_reference(x2, params)
    assert out2.shape == (40, OUTPUTS)
    assert jnp.allclose(out2, ref2, atol=1e-4, rtol=1e-4), "ragged-batch mismatch"

    # 3) bf16 compute path (recommended on v5e/v6e/v7x), f32 MXU accumulation,
    #    f32 input stream + in-kernel cast, f32 output.
    out_bf = jax.block_until_ready(dnn3_forward(x, prepared_bf16))
    assert out_bf.dtype == jnp.float32
    assert jnp.allclose(out_bf, ref, atol=5e-2, rtol=5e-2), "bf16 mismatch"

    # 4) bf16 compute + bf16 output (halved writeback bytes for bf16 consumers).
    out_bf16 = jax.block_until_ready(
        dnn3_forward(x, prepared_bf16, out_dtype=jnp.bfloat16))
    assert out_bf16.dtype == jnp.bfloat16
    assert jnp.allclose(out_bf16.astype(jnp.float32), ref, atol=6e-2, rtol=6e-2), \
        "bf16-output mismatch"

    print("KERNEL_OK")
</pallas_src>

<mosaic_0001>
module attributes {stable_mosaic.version = 11 : i64} {
  func.func @dnn3_kernel(%arg0: i32, %arg1: memref<8x32xf32, #tpu.memory_space<vmem>>, %arg2: memref<32x256xf32, #tpu.memory_space<vmem>>, %arg3: memref<1x256xf32, #tpu.memory_space<vmem>>, %arg4: memref<256x128xf32, #tpu.memory_space<vmem>>, %arg5: memref<1x128xf32, #tpu.memory_space<vmem>>, %arg6: memref<128x128xf32, #tpu.memory_space<vmem>>, %arg7: memref<1x128xf32, #tpu.memory_space<vmem>>, %arg8: memref<128x16xf32, #tpu.memory_space<vmem>>, %arg9: memref<1x16xf32, #tpu.memory_space<vmem>>, %arg10: memref<8x16xf32, #tpu.memory_space<vmem>>) attributes {dimension_semantics = [#tpu.dimension_semantics<parallel>], iteration_bounds = array<i64: 2>, scalar_prefetch = 0 : i64, scratch_operands = 0 : i64, tpu.core_type = #tpu.core_type<tc>, window_params = [{transform_indices = @transform_0, window_bounds = array<i64: 8, 32>}, {pipeline_mode = #tpu.pipeline_mode<synchronous>, transform_indices = @transform_1, window_bounds = array<i64: 32, 256>}, {pipeline_mode = #tpu.pipeline_mode<synchronous>, transform_indices = @transform_2, window_bounds = array<i64: 1, 256>}, {pipeline_mode = #tpu.pipeline_mode<synchronous>, transform_indices = @transform_3, window_bounds = array<i64: 256, 128>}, {pipeline_mode = #tpu.pipeline_mode<synchronous>, transform_indices = @transform_4, window_bounds = array<i64: 1, 128>}, {pipeline_mode = #tpu.pipeline_mode<synchronous>, transform_indices = @transform_5, window_bounds = array<i64: 128, 128>}, {pipeline_mode = #tpu.pipeline_mode<synchronous>, transform_indices = @transform_6, window_bounds = array<i64: 1, 128>}, {pipeline_mode = #tpu.pipeline_mode<synchronous>, transform_indices = @transform_7, window_bounds = array<i64: 128, 16>}, {pipeline_mode = #tpu.pipeline_mode<synchronous>, transform_indices = @transform_8, window_bounds = array<i64: 1, 16>}, {transform_indices = @transform_9, window_bounds = array<i64: 8, 16>}]} {
    %c0 = arith.constant 0 : index
    %c0_0 = arith.constant 0 : index
    %0 = vector.load %arg1[%c0, %c0_0] : memref<8x32xf32, #tpu.memory_space<vmem>>, vector<8x32xf32>
    %c0_1 = arith.constant 0 : index
    %c0_2 = arith.constant 0 : index
    %1 = vector.load %arg2[%c0_1, %c0_2] : memref<32x256xf32, #tpu.memory_space<vmem>>, vector<32x256xf32>
    %cst = arith.constant dense<0.000000e+00> : vector<8x256xf32>
    %2 = tpu.matmul %0, %1, %cst {dimension_numbers = #tpu.dot_dimension_numbers<[1], [0], [0], [1], [0, 0, 1, 1], [], []>} : vector<8x32xf32>, vector<32x256xf32>, vector<8x256xf32> -> vector<8x256xf32>
    %c0_3 = arith.constant 0 : index
    %c0_4 = arith.constant 0 : index
    %3 = vector.load %arg3[%c0_3, %c0_4] : memref<1x256xf32, #tpu.memory_space<vmem>>, vector<1x256xf32>
    %4 = vector.broadcast %3 : vector<1x256xf32> to vector<8x256xf32>
    %5 = arith.addf %2, %4 : vector<8x256xf32>
    %cst_5 = arith.constant 0.000000e+00 : f32
    %6 = vector.broadcast %cst_5 : f32 to vector<8x256xf32>
    %7 = arith.maximumf %5, %6 : vector<8x256xf32>
    %c0_6 = arith.constant 0 : index
    %c0_7 = arith.constant 0 : index
    %8 = vector.load %arg4[%c0_6, %c0_7] : memref<256x128xf32, #tpu.memory_space<vmem>>, vector<256x128xf32>
    %cst_8 = arith.constant dense<0.000000e+00> : vector<8x128xf32>
    %9 = tpu.matmul %7, %8, %cst_8 {dimension_numbers = #tpu.dot_dimension_numbers<[1], [0], [0], [1], [0, 0, 1, 1], [], []>} : vector<8x256xf32>, vector<256x128xf32>, vector<8x128xf32> -> vector<8x128xf32>
    %c0_9 = arith.constant 0 : index
    %c0_10 = arith.constant 0 : index
    %10 = vector.load %arg5[%c0_9, %c0_10] : memref<1x128xf32, #tpu.memory_space<vmem>>, vector<1x128xf32>
    %11 = vector.broadcast %10 : vector<1x128xf32> to vector<8x128xf32>
    %12 = arith.addf %9, %11 : vector<8x128xf32>
    %cst_11 = arith.constant 0.000000e+00 : f32
    %13 = vector.broadcast %cst_11 : f32 to vector<8x128xf32>
    %14 = arith.maximumf %12, %13 : vector<8x128xf32>
    %c0_12 = arith.constant 0 : index
    %c0_13 = arith.constant 0 : index
    %15 = vector.load %arg6[%c0_12, %c0_13] : memref<128x128xf32, #tpu.memory_space<vmem>>, vector<128x128xf32>
    %cst_14 = arith.constant dense<0.000000e+00> : vector<8x128xf32>
    %16 = tpu.matmul %14, %15, %cst_14 {dimension_numbers = #tpu.dot_dimension_numbers<[1], [0], [0], [1], [0, 0, 1, 1], [], []>} : vector<8x128xf32>, vector<128x128xf32>, vector<8x128xf32> -> vector<8x128xf32>
    %c0_15 = arith.constant 0 : index
    %c0_16 = arith.constant 0 : index
    %17 = vector.load %arg7[%c0_15, %c0_16] : memref<1x128xf32, #tpu.memory_space<vmem>>, vector<1x128xf32>
    %18 = vector.broadcast %17 : vector<1x128xf32> to vector<8x128xf32>
    %19 = arith.addf %16, %18 : vector<8x128xf32>
    %cst_17 = arith.constant 0.000000e+00 : f32
    %20 = vector.broadcast %cst_17 : f32 to vector<8x128xf32>
    %21 = arith.maximumf %19, %20 : vector<8x128xf32>
    %c0_18 = arith.constant 0 : index
    %c0_19 = arith.constant 0 : index
    %22 = vector.load %arg8[%c0_18, %c0_19] : memref<128x16xf32, #tpu.memory_space<vmem>>, vector<128x16xf32>
    %cst_20 = arith.constant dense<0.000000e+00> : vector<8x16xf32>
    %23 = tpu.matmul %21, %22, %cst_20 {dimension_numbers = #tpu.dot_dimension_numbers<[1], [0], [0], [1], [0, 0, 1, 1], [], []>} : vector<8x128xf32>, vector<128x16xf32>, vector<8x16xf32> -> vector<8x16xf32>
    %c0_21 = arith.constant 0 : index
    %c0_22 = arith.constant 0 : index
    %24 = vector.load %arg9[%c0_21, %c0_22] : memref<1x16xf32, #tpu.memory_space<vmem>>, vector<1x16xf32>
    %25 = vector.broadcast %24 : vector<1x16xf32> to vector<8x16xf32>
    %26 = arith.addf %23, %25 : vector<8x16xf32>
    %c0_23 = arith.constant 0 : index
    %c0_24 = arith.constant 0 : index
    %27 = vector.load %arg10[%c0_23, %c0_24] : memref<8x16xf32, #tpu.memory_space<vmem>>, vector<8x16xf32>
    tpu.vector_store %arg10[%c0_23, %c0_24], %26 {strides = array<i32>} : memref<8x16xf32, #tpu.memory_space<vmem>>, vector<8x16xf32>,
    return
  }
  func.func @transform_0(%arg0: i32) -> (i32, i32) {
    %c0_i32 = arith.constant 0 : i32
    %c0_i32_0 = arith.constant 0 : i32
    return %arg0, %c0_i32 : i32, i32
  }
  func.func @transform_1(%arg0: i32) -> (i32, i32) {
    %c0_i32 = arith.constant 0 : i32
    %c0_i32_0 = arith.constant 0 : i32
    %c0_i32_1 = arith.constant 0 : i32
    return %c0_i32, %c0_i32_0 : i32, i32
  }
  func.func @transform_2(%arg0: i32) -> (i32, i32) {
    %c0_i32 = arith.constant 0 : i32
    %c0_i32_0 = arith.constant 0 : i32
    %c0_i32_1 = arith.constant 0 : i32
    return %c0_i32, %c0_i32_0 : i32, i32
  }
  func.func @transform_3(%arg0: i32) -> (i32, i32) {
    %c0_i32 = arith.constant 0 : i32
    %c0_i32_0 = arith.constant 0 : i32
    %c0_i32_1 = arith.constant 0 : i32
    return %c0_i32, %c0_i32_0 : i32, i32
  }
  func.func @transform_4(%arg0: i32) -> (i32, i32) {
    %c0_i32 = arith.constant 0 : i32
    %c0_i32_0 = arith.constant 0 : i32
    %c0_i32_1 = arith.constant 0 : i32
    return %c0_i32, %c0_i32_0 : i32, i32
  }
  func.func @transform_5(%arg0: i32) -> (i32, i32) {
    %c0_i32 = arith.constant 0 : i32
    %c0_i32_0 = arith.constant 0 : i32
    %c0_i32_1 = arith.constant 0 : i32
    return %c0_i32, %c0_i32_0 : i32, i32
  }
  func.func @transform_6(%arg0: i32) -> (i32, i32) {
    %c0_i32 = arith.constant 0 : i32
    %c0_i32_0 = arith.constant 0 : i32
    %c0_i32_1 = arith.constant 0 : i32
    return %c0_i32, %c0_i32_0 : i32, i32
  }
  func.func @transform_7(%arg0: i32) -> (i32, i32) {
    %c0_i32 = arith.constant 0 : i32
    %c0_i32_0 = arith.constant 0 : i32
    %c0_i32_1 = arith.constant 0 : i32
    return %c0_i32, %c0_i32_0 : i32, i32
  }
  func.func @transform_8(%arg0: i32) -> (i32, i32) {
    %c0_i32 = arith.constant 0 : i32
    %c0_i32_0 = arith.constant 0 : i32
    %c0_i32_1 = arith.constant 0 : i32
    return %c0_i32, %c0_i32_0 : i32, i32
  }
  func.func @transform_9(%arg0: i32) -> (i32, i32) {
    %c0_i32 = arith.constant 0 : i32
    %c0_i32_0 = arith.constant 0 : i32
    return %arg0, %c0_i32 : i32, i32
  }
}

</mosaic_0001>

<llo_original>
// kernel: tpu_custom_call.1
$region0: #{tpu_custom_call.1}
  #allocation0 [shape = 'u32[]', space=smem, size = 0x4, offset = 0x4, fixed_abs, tag = 'smem constant byte address 0x4 - core index']
  #allocation1 [shape = 'u32[72,128]{1,0:T(1,128)}', space=vmem, size = 0x9000, scoped, tag = 'internal scratch']
  %s0 = inlined_call_operand.vmem [shape: f32[16,32], index: 0, kind: input, shape index: {}]
  %s1 = inlined_call_operand.hbm [shape: f32[32,256], index: 1, kind: input, shape index: {}]
  %s2 = inlined_call_operand.vmem [shape: f32[1,256], index: 2, kind: input, shape index: {}]
  %s3 = inlined_call_operand.hbm [shape: f32[256,128], index: 3, kind: input, shape index: {}]
  %s4 = inlined_call_operand.vmem [shape: f32[1,128], index: 4, kind: input, shape index: {}]
  %s5 = inlined_call_operand.vmem [shape: f32[128,128], index: 5, kind: input, shape index: {}]
  %s6 = inlined_call_operand.vmem [shape: f32[1,128], index: 6, kind: input, shape index: {}]
  %s7 = inlined_call_operand.vmem [shape: f32[128,16], index: 7, kind: input, shape index: {}]
  %s8 = inlined_call_operand.vmem [shape: f32[1,16], index: 8, kind: input, shape index: {}]
  %s9 = inlined_call_operand.hbm [shape: f32[16,16], index: 9, kind: output, shape index: {}]
  %s10 = sld [smem:[#allocation0]]
  $region77: #{tpu_custom_call.1} parent=0
    _
  %s12 = ssub.s32 1, %s10
  %s13 = scalar_select 0, %s12, %s10
  $region1: #{tpu_custom_call.1} parent=0
    #allocation2 [shape = 'u8[32768]{0}', space=vmem, size = 0x8000, scoped, tag = 'input window, operand 1, single buffered']
    #allocation3 [shape = 's32[2]{0}', space=sflag, size = 0x8, scoped, tag = 'scoped memory for tpu_custom_call.1']
    #allocation4 [shape = 's32[2]{0}', space=sflag, size = 0x8, scoped, tag = 'scoped memory for tpu_custom_call.1']
    #allocation5 [shape = 'u8[131072]{0}', space=vmem, size = 0x20000, scoped, tag = 'input window, operand 3, single buffered']
    #allocation6 [shape = 's32[1]{0}', space=sflag, size = 0x4, scoped, tag = 'scoped memory for tpu_custom_call.1']
    #allocation7 [shape = 'u8[8192]{0}', space=vmem, size = 0x2000, scoped, tag = 'output window, operand 0']
    %14 = vsyncpa [#allocation3], 0
    %15 = vsyncpa [#allocation6], 0
    %16 = vsyncpa [#allocation4], 0
    %s17 = scalar_lea.sflag [#allocation4], 1
    %18 = vsyncpa %s17, 0
    loop: start=0, step=1, limit=4
    $region2: #{tpu_custom_call.1} parent=1 // loop_pre_header
      _
    $region3: #{tpu_custom_call.1} parent=1 // loop_header
      %s20 = sphi 0, %s24
      %p21 = scmp.ge.s32.totalorder %s20, 4
      %s30 = sphi 0, %s32
      %s33 = sphi 0, %s30
      %s34 = sphi 0, %s33
      %s50 = sphi 0, %s34
      %s54 = sphi 0, %s54
      %s56 = sphi 0, %s54
      %s57 = sphi 0, %s56
      %s71 = sphi 0, %s57
      %s75 = sphi 0, %s75
      %s77 = sphi 0, %s75
      %s78 = sphi 0, %s77
      %s92 = sphi 0, %s78
      %s96 = sphi 0, %s96
      %s98 = sphi 0, %s96
      %s99 = sphi 0, %s98
      %s113 = sphi 0, %s99
      %s117 = sphi 0, %s117
      %s119 = sphi 0, %s117
      %s120 = sphi 0, %s119
      %s134 = sphi 0, %s120
      %s138 = sphi 0, %s138
      %s140 = sphi 0, %s138
      %s141 = sphi 0, %s140
      %s155 = sphi 0, %s141
      %s159 = sphi 0, %s159
      %s161 = sphi 0, %s159
      %s162 = sphi 0, %s161
      %s176 = sphi 0, %s162
      %s180 = sphi 0, %s180
      %s182 = sphi 0, %s180
      %s183 = sphi 0, %s182
      %s197 = sphi 0, %s183
      %s201 = sphi 0, %s201
      %s203 = sphi 0, %s201
      %s204 = sphi 0, %s203
      %s218 = sphi 0, %s204
      %s224 = sphi 0, %s226
      %s227 = sphi 0, %s224
      %s228 = sphi 0, %s227
      %s244 = sphi 0, %s228
    $region4: #{tpu_custom_call.1} parent=1 // loop_header_branch
      %23 = sbr.rel (%p21) target = $region8
    $region5: #{tpu_custom_call.1} parent=1 // loop_body
      %s25 = ssub.s32 %s20, 1
      %s26 = ssub.s32 %s20, 2
      %s27 = sadd.s32 %s20, 1
      %s28 = ssub.s32 %s20, %s27
      %p29 = scmp.eq.s32.totalorder %s28, 0
      %s31 = sadd.s32 %s30, 1
      %s32 = scalar_select %p29, %s30, %s31
      %p35 = pneg %p29
      %p36 = scmp.eq.s32.totalorder %s20, 1
      %p37 = por %p35, %p36
      %p38 = scmp.ne.s32.totalorder %s30, %s33
      %p39 = scmp.eq.s32.totalorder %s20, 0
      %p40 = por %p38, %p39
      %p41 = scmp.ne.s32.totalorder %s30, %s33
      %p42 = scmp.eq.s32.totalorder %s25, 1
      %p43 = por %p41, %p42
      %p44 = scmp.ne.s32.totalorder %s33, %s34
      %p45 = scmp.eq.s32.totalorder %s25, 0
      %p46 = por %p44, %p45
      %p47 = scmp.ne.s32.totalorder %s33, %s34
      %p48 = scmp.eq.s32.totalorder %s26, 1
      %p49 = por %p47, %p48
      %p51 = scmp.ne.s32.totalorder %s34, %s50
      %p52 = scmp.eq.s32.totalorder %s26, 0
      %p53 = por %p51, %p52
      %s55 = sadd.s32 %s54, 1
      %p58 = scmp.eq.s32.totalorder %s20, 1
      %p59 = scmp.ne.s32.totalorder %s54, %s56
      %p60 = scmp.eq.s32.totalorder %s20, 0
      %p61 = por %p59, %p60
      %p62 = scmp.ne.s32.totalorder %s54, %s56
      %p63 = scmp.eq.s32.totalorder %s25, 1
      %p64 = por %p62, %p63
      %p65 = scmp.ne.s32.totalorder %s56, %s57
      %p66 = scmp.eq.s32.totalorder %s25, 0
      %p67 = por %p65, %p66
      %p68 = scmp.ne.s32.totalorder %s56, %s57
      %p69 = scmp.eq.s32.totalorder %s26, 1
      %p70 = por %p68, %p69
      %p72 = scmp.ne.s32.totalorder %s57, %s71
      %p73 = scmp.eq.s32.totalorder %s26, 0
      %p74 = por %p72, %p73
      %s76 = sadd.s32 %s75, 1
      %p79 = scmp.eq.s32.totalorder %s20, 1
      %p80 = scmp.ne.s32.totalorder %s75, %s77
      %p81 = scmp.eq.s32.totalorder %s20, 0
      %p82 = por %p80, %p81
      %p83 = scmp.ne.s32.totalorder %s75, %s77
      %p84 = scmp.eq.s32.totalorder %s25, 1
      %p85 = por %p83, %p84
      %p86 = scmp.ne.s32.totalorder %s77, %s78
      %p87 = scmp.eq.s32.totalorder %s25, 0
      %p88 = por %p86, %p87
      %p89 = scmp.ne.s32.totalorder %s77, %s78
      %p90 = scmp.eq.s32.totalorder %s26, 1
      %p91 = por %p89, %p90
      %p93 = scmp.ne.s32.totalorder %s78, %s92
      %p94 = scmp.eq.s32.totalorder %s26, 0
      %p95 = por %p93, %p94
      %s97 = sadd.s32 %s96, 1
      %p100 = scmp.eq.s32.totalorder %s20, 1
      %p101 = scmp.ne.s32.totalorder %s96, %s98
      %p102 = scmp.eq.s32.totalorder %s20, 0
      %p103 = por %p101, %p102
      %p104 = scmp.ne.s32.totalorder %s96, %s98
      %p105 = scmp.eq.s32.totalorder %s25, 1
      %p106 = por %p104, %p105
      %p107 = scmp.ne.s32.totalorder %s98, %s99
      %p108 = scmp.eq.s32.totalorder %s25, 0
      %p109 = por %p107, %p108
      %p110 = scmp.ne.s32.totalorder %s98, %s99
      %p111 = scmp.eq.s32.totalorder %s26, 1
      %p112 = por %p110, %p111
      %p114 = scmp.ne.s32.totalorder %s99, %s113
      %p115 = scmp.eq.s32.totalorder %s26, 0
      %p116 = por %p114, %p115
      %s118 = sadd.s32 %s117, 1
      %p121 = scmp.eq.s32.totalorder %s20, 1
      %p122 = scmp.ne.s32.totalorder %s117, %s119
      %p123 = scmp.eq.s32.totalorder %s20, 0
      %p124 = por %p122, %p123
      %p125 = scmp.ne.s32.totalorder %s117, %s119
      %p126 = scmp.eq.s32.totalorder %s25, 1
      %p127 = por %p125, %p126
      %p128 = scmp.ne.s32.totalorder %s119, %s120
      %p129 = scmp.eq.s32.totalorder %s25, 0
      %p130 = por %p128, %p129
      %p131 = scmp.ne.s32.totalorder %s119, %s120
      %p132 = scmp.eq.s32.totalorder %s26, 1
      %p133 = por %p131, %p132
      %p135 = scmp.ne.s32.totalorder %s120, %s134
      %p136 = scmp.eq.s32.totalorder %s26, 0
      %p137 = por %p135, %p136
      %s139 = sadd.s32 %s138, 1
      %p142 = scmp.eq.s32.totalorder %s20, 1
      %p143 = scmp.ne.s32.totalorder %s138, %s140
      %p144 = scmp.eq.s32.totalorder %s20, 0
      %p145 = por %p143, %p144
      %p146 = scmp.ne.s32.totalorder %s138, %s140
      %p147 = scmp.eq.s32.totalorder %s25, 1
      %p148 = por %p146, %p147
      %p149 = scmp.ne.s32.totalorder %s140, %s141
      %p150 = scmp.eq.s32.totalorder %s25, 0
      %p151 = por %p149, %p150
      %p152 = scmp.ne.s32.totalorder %s140, %s141
      %p153 = scmp.eq.s32.totalorder %s26, 1
      %p154 = por %p152, %p153
      %p156 = scmp.ne.s32.totalorder %s141, %s155
      %p157 = scmp.eq.s32.totalorder %s26, 0
      %p158 = por %p156, %p157
      %s160 = sadd.s32 %s159, 1
      %p163 = scmp.eq.s32.totalorder %s20, 1
      %p164 = scmp.ne.s32.totalorder %s159, %s161
      %p165 = scmp.eq.s32.totalorder %s20, 0
      %p166 = por %p164, %p165
      %p167 = scmp.ne.s32.totalorder %s159, %s161
      %p168 = scmp.eq.s32.totalorder %s25, 1
      %p169 = por %p167, %p168
      %p170 = scmp.ne.s32.totalorder %s161, %s162
      %p171 = scmp.eq.s32.totalorder %s25, 0
      %p172 = por %p170, %p171
      %p173 = scmp.ne.s32.totalorder %s161, %s162
      %p174 = scmp.eq.s32.totalorder %s26, 1
      %p175 = por %p173, %p174
      %p177 = scmp.ne.s32.totalorder %s162, %s176
      %p178 = scmp.eq.s32.totalorder %s26, 0
      %p179 = por %p177, %p178
      %s181 = sadd.s32 %s180, 1
      %p184 = scmp.eq.s32.totalorder %s20, 1
      %p185 = scmp.ne.s32.totalorder %s180, %s182
      %p186 = scmp.eq.s32.totalorder %s20, 0
      %p187 = por %p185, %p186
      %p188 = scmp.ne.s32.totalorder %s180, %s182
      %p189 = scmp.eq.s32.totalorder %s25, 1
      %p190 = por %p188, %p189
      %p191 = scmp.ne.s32.totalorder %s182, %s183
      %p192 = scmp.eq.s32.totalorder %s25, 0
      %p193 = por %p191, %p192
      %p194 = scmp.ne.s32.totalorder %s182, %s183
      %p195 = scmp.eq.s32.totalorder %s26, 1
      %p196 = por %p194, %p195
      %p198 = scmp.ne.s32.totalorder %s183, %s197
      %p199 = scmp.eq.s32.totalorder %s26, 0
      %p200 = por %p198, %p199
      %s202 = sadd.s32 %s201, 1
      %p205 = scmp.eq.s32.totalorder %s20, 1
      %p206 = scmp.ne.s32.totalorder %s201, %s203
      %p207 = scmp.eq.s32.totalorder %s20, 0
      %p208 = por %p206, %p207
      %p209 = scmp.ne.s32.totalorder %s201, %s203
      %p210 = scmp.eq.s32.totalorder %s25, 1
      %p211 = por %p209, %p210
      %p212 = scmp.ne.s32.totalorder %s203, %s204
      %p213 = scmp.eq.s32.totalorder %s25, 0
      %p214 = por %p212, %p213
      %p215 = scmp.ne.s32.totalorder %s203, %s204
      %p216 = scmp.eq.s32.totalorder %s26, 1
      %p217 = por %p215, %p216
      %p219 = scmp.ne.s32.totalorder %s204, %s218
      %p220 = scmp.eq.s32.totalorder %s26, 0
      %p221 = por %p219, %p220
      %s222 = ssub.s32 %s20, %s27
      %p223 = scmp.eq.s32.totalorder %s222, 0
      %s225 = sadd.s32 %s224, 1
      %s226 = scalar_select %p223, %s224, %s225
      %p229 = pneg %p223
      %p230 = scmp.eq.s32.totalorder %s20, 1
      %p231 = por %p229, %p230
      %p232 = scmp.ne.s32.totalorder %s224, %s227
      %p233 = scmp.eq.s32.totalorder %s20, 0
      %p234 = por %p232, %p233
      %p235 = scmp.ne.s32.totalorder %s224, %s227
      %p236 = scmp.eq.s32.totalorder %s25, 1
      %p237 = por %p235, %p236
      %p238 = scmp.ne.s32.totalorder %s227, %s228
      %p239 = scmp.eq.s32.totalorder %s25, 0
      %p240 = por %p238, %p239
      %p241 = scmp.ne.s32.totalorder %s227, %s228
      %p242 = scmp.eq.s32.totalorder %s26, 1
      %p243 = por %p241, %p242
      %p245 = scmp.ne.s32.totalorder %s228, %s244
      %p246 = scmp.eq.s32.totalorder %s26, 0
      %p247 = por %p245, %p246
      %p248 = scmp.le.s32.totalorder 1, %s20
      %p249 = scmp.lt.s32.totalorder %s20, 3
      %p250 = pnand %p248, %p249
      %p251 = pneg %p250
      // Predicated region
      $region9: #{tpu_custom_call.1} parent=5 // pred_check
        _
      $region10: #{tpu_custom_call.1} parent=5 // pred_check_branch
        %253 = sbr.rel (%p250) target = $region12
      $region11: #{tpu_custom_call.1} parent=5 // pred_region
        %s254 = ssub.s32 %s20, 1
        // Predicated region
        $region13: #{tpu_custom_call.1} parent=11 // pred_check
          %p255 = pneg %p67
        $region14: #{tpu_custom_call.1} parent=11 // pred_check_branch
          %257 = sbr.rel (%p255) target = $region16
        $region15: #{tpu_custom_call.1} parent=11 // pred_region
          %259 = vsyncadd [#allocation3], 0
          %s260 = sshll.u32 %s1, 4
          %s261 = int_to_ptr.hbm [resolvable:$true] %s260
          %s262 = sshll.u32 [#allocation2], 4
          %s263 = int_to_ptr.vmem [resolvable:$true] %s262
          %268 = dma.hbm_to_vmem [thread:$0]  %s261, 1024, %s263, [#allocation3], 256, 256, 16
        $region16: #{tpu_custom_call.1} parent=11 // pred_fallthru
          _
        // Predicated region
        $region17: #{tpu_custom_call.1} parent=11 // pred_check
          %p269 = pneg %p88
        $region18: #{tpu_custom_call.1} parent=11 // pred_check_branch
          %271 = sbr.rel (%p269) target = $region20
        $region19: #{tpu_custom_call.1} parent=11 // pred_region
          _
        $region20: #{tpu_custom_call.1} parent=11 // pred_fallthru
          _
        // Predicated region
        $region21: #{tpu_custom_call.1} parent=11 // pred_check
          %p272 = pneg %p109
        $region22: #{tpu_custom_call.1} parent=11 // pred_check_branch
          %274 = sbr.rel (%p272) target = $region24
        $region23: #{tpu_custom_call.1} parent=11 // pred_region
          %276 = vsyncadd [#allocation6], 0
          %s277 = sshll.u32 %s3, 4
          %s278 = int_to_ptr.hbm [resolvable:$true] %s277
          %s279 = sshll.u32 [#allocation5], 4
          %s280 = int_to_ptr.vmem [resolvable:$true] %s279
          %285 = dma.hbm_to_vmem [thread:$0]  %s278, 4096, %s280, [#allocation6], 128, 128, 8
        $region24: #{tpu_custom_call.1} parent=11 // pred_fallthru
          _
        // Predicated region
        $region25: #{tpu_custom_call.1} parent=11 // pred_check
          %p286 = pneg %p130
        $region26: #{tpu_custom_call.1} parent=11 // pred_check_branch
          %288 = sbr.rel (%p286) target = $region28
        $region27: #{tpu_custom_call.1} parent=11 // pred_region
          _
        $region28: #{tpu_custom_call.1} parent=11 // pred_fallthru
          _
        // Predicated region
        $region29: #{tpu_custom_call.1} parent=11 // pred_check
          %p289 = pneg %p151
        $region30: #{tpu_custom_call.1} parent=11 // pred_check_branch
          %291 = sbr.rel (%p289) target = $region32
        $region31: #{tpu_custom_call.1} parent=11 // pred_region
          _
        $region32: #{tpu_custom_call.1} parent=11 // pred_fallthru
          _
        // Predicated region
        $region33: #{tpu_custom_call.1} parent=11 // pred_check
          %p292 = pneg %p172
        $region34: #{tpu_custom_call.1} parent=11 // pred_check_branch
          %294 = sbr.rel (%p292) target = $region36
        $region35: #{tpu_custom_call.1} parent=11 // pred_region
          _
        $region36: #{tpu_custom_call.1} parent=11 // pred_fallthru
          _
        // Predicated region
        $region37: #{tpu_custom_call.1} parent=11 // pred_check
          %p295 = pneg %p193
        $region38: #{tpu_custom_call.1} parent=11 // pred_check_branch
          %297 = sbr.rel (%p295) target = $region40
        $region39: #{tpu_custom_call.1} parent=11 // pred_region
          _
        $region40: #{tpu_custom_call.1} parent=11 // pred_fallthru
          _
        // Predicated region
        $region41: #{tpu_custom_call.1} parent=11 // pred_check
          %p298 = pneg %p214
        $region42: #{tpu_custom_call.1} parent=11 // pred_check_branch
          %300 = sbr.rel (%p298) target = $region44
        $region43: #{tpu_custom_call.1} parent=11 // pred_region
          _
        $region44: #{tpu_custom_call.1} parent=11 // pred_fallthru
          _
      $region12: #{tpu_custom_call.1} parent=5 // pred_fallthru
        _
      %p301 = scmp.lt.s32.totalorder %s20, 2
      // Predicated region
      $region45: #{tpu_custom_call.1} parent=5 // pred_check
        %p302 = pneg %p301
      $region46: #{tpu_custom_call.1} parent=5 // pred_check_branch
        %304 = sbr.rel (%p302) target = $region48
      $region47: #{tpu_custom_call.1} parent=5 // pred_region
        // Predicated region
        $region49: #{tpu_custom_call.1} parent=47 // pred_check
          %p305 = pneg %p40
        $region50: #{tpu_custom_call.1} parent=47 // pred_check_branch
          %307 = sbr.rel (%p305) target = $region52
        $region51: #{tpu_custom_call.1} parent=47 // pred_region
          %p308 = scmp.lt.s32.totalorder %s20, 1
          %s309 = scalar_select %p308, %s20, 1
          %s310 = smul.addr %s309, 8
          %s311 = scalar_lea.vmem %s0, %s310
        $region52: #{tpu_custom_call.1} parent=47 // pred_fallthru
          _
      $region48: #{tpu_custom_call.1} parent=5 // pred_fallthru
        _
      %p312 = scmp.le.s32.totalorder 1, %s20
      %p313 = scmp.lt.s32.totalorder %s20, 3
      %p314 = pnand %p312, %p313
      %p315 = pneg %p314
      // Predicated region
      $region53: #{tpu_custom_call.1} parent=5 // pred_check
        _
      $region54: #{tpu_custom_call.1} parent=5 // pred_check_branch
        %317 = sbr.rel (%p314) target = $region56
      $region55: #{tpu_custom_call.1} parent=5 // pred_region
        %s318 = ssub.s32 %s20, 1
        // Predicated region
        $region57: #{tpu_custom_call.1} parent=55 // pred_check
          %p319 = pneg %p67
        $region58: #{tpu_custom_call.1} parent=55 // pred_check_branch
          %321 = sbr.rel (%p319) target = $region60
        $region59: #{tpu_custom_call.1} parent=55 // pred_region
          %323 = dma.done [#allocation3], 1024
        $region60: #{tpu_custom_call.1} parent=55 // pred_fallthru
          _
        // Predicated region
        $region61: #{tpu_custom_call.1} parent=55 // pred_check
          %p324 = pneg %p109
        $region62: #{tpu_custom_call.1} parent=55 // pred_check_branch
          %326 = sbr.rel (%p324) target = $region64
        $region63: #{tpu_custom_call.1} parent=55 // pred_region
          %328 = dma.done [#allocation6], 4096
        $region64: #{tpu_custom_call.1} parent=55 // pred_fallthru
          _
        %p329 = scmp.lt.s32.totalorder %s25, 1
        %s330 = scalar_select %p329, %s25, 1
        %s331 = smul.addr %s330, 8
        %s332 = scalar_lea.vmem %s0, %s331
        %p333 = pneg %p46
        %p334 = pneg %p43
        %p335 = pneg %p67
        %p336 = pneg %p64
        %p337 = pneg %p88
        %p338 = pneg %p85
        %p339 = pneg %p109
        %p340 = pneg %p106
        %p341 = pneg %p130
        %p342 = pneg %p127
        %p343 = pneg %p151
        %p344 = pneg %p148
        %p345 = pneg %p172
        %p346 = pneg %p169
        %p347 = pneg %p193
        %p348 = pneg %p190
        %p349 = pneg %p214
        %p350 = pneg %p211
        %p351 = pneg %p240
        %p352 = pneg %p237
        %s353 = sand.u32 %s227, 1
        %s354 = scalar_lea.sflag [#allocation4], %s353
        %s355 = sand.u32 %s227, 1
        %s356 = smul.addr %s355, 8
        %s357 = scalar_lea.vmem [#allocation7], %s356
        %p358 = scmp.lt.s32.totalorder %s25, 1
        %s359 = scalar_select %p358, %s25, 1
        %s360 = smul.addr %s359, 8
        %s361 = scalar_lea.vmem %s0, %s360
        %v362 = vld [vmem:[%s361] sm:$0xff]
        %v363 = vld [vmem:[#allocation2] sm:$0xff]
        %v364 = vld [vmem:[#allocation2 + $0x8] sm:$0xff]
        %v365 = vld [vmem:[#allocation2 + $0x10] sm:$0xff]
        %v366 = vld [vmem:[#allocation2 + $0x18] sm:$0xff]
        %v367 = vld [vmem:[#allocation2 + $0x20] sm:$0xff]
        %v368 = vld [vmem:[#allocation2 + $0x28] sm:$0xff]
        %v369 = vld [vmem:[#allocation2 + $0x30] sm:$0xff]
        %v370 = vld [vmem:[#allocation2 + $0x38] sm:$0xff]
        %v371 = vld [vmem:[%s2] sm:$0x3]
        %v373 = vperm.slane %v371, 0
        %v374 = vperm.slane %v371, 1
        %vm377 = vcmask 261120
        %v379 = vsel %vm377, %v362, 0
        %381 = vmatpush.msra.mxu0 0.0
        %382 = vmatpush.msra.mxu0 0.0
        %383 = vmatpush.msra.mxu0 0.0
        %384 = vmatpush.msra.mxu0 0.0
        %385 = vmatpush.msra.mxu0 0.0
        %386 = vmatpush.msra.mxu0 0.0
        %387 = vmatpush.msra.mxu0 0.0
        %388 = vmatpush.msra.mxu0 0.0
        %389 = vmatpush.msra.mxu0 0.0
        %390 = vmatpush.msra.mxu0 0.0
        %391 = vmatpush.msra.mxu0 0.0
        %392 = vmatpush.msra.mxu0 0.0
        %393 = vmatpush.msra.mxu0 %v369
        %394 = vmatpush.msra.mxu0 %v367
        %395 = vmatpush.msra.mxu0 %v365
        %396 = vmatpush.msra.mxu0 %v363
        %397 = vmatmul.f32.gmra.mxu0 %v379
        %v398 = vpop.f32.mrf.mxu0
        %v399 = vadd.f32 %v373, %v398
        %400 = vdwg.mxu0
        %401 = vmatpush.msra.mxu0 0.0
        %402 = vmatpush.msra.mxu0 0.0
        %403 = vmatpush.msra.mxu0 0.0
        %404 = vmatpush.msra.mxu0 0.0
        %405 = vmatpush.msra.mxu0 0.0
        %406 = vmatpush.msra.mxu0 0.0
        %407 = vmatpush.msra.mxu0 0.0
        %408 = vmatpush.msra.mxu0 0.0
        %409 = vmatpush.msra.mxu0 0.0
        %410 = vmatpush.msra.mxu0 0.0
        %411 = vmatpush.msra.mxu0 0.0
        %412 = vmatpush.msra.mxu0 0.0
        %413 = vmatpush.msra.mxu0 %v370
        %414 = vmatpush.msra.mxu0 %v368
        %415 = vmatpush.msra.mxu0 %v366
        %416 = vmatpush.msra.mxu0 %v364
        %417 = vmatmul.f32.gmra.mxu0 %v379
        %v418 = vpop.f32.mrf.mxu0
        %v419 = vadd.f32 %v374, %v418
        %420 = vdwg.mxu0
        %v421 = vmax.f32 %v399, 0.0
        %v422 = vmax.f32 %v419, 0.0
        %v423 = vld [vmem:[#allocation5] sm:$0xff]
        %v424 = vld [vmem:[#allocation5 + $0x8] sm:$0xff]
        %v425 = vld [vmem:[#allocation5 + $0x10] sm:$0xff]
        %v426 = vld [vmem:[#allocation5 + $0x18] sm:$0xff]
        %v427 = vld [vmem:[#allocation5 + $0x20] sm:$0xff]
        %v428 = vld [vmem:[#allocation5 + $0x28] sm:$0xff]
        %v429 = vld [vmem:[#allocation5 + $0x30] sm:$0xff]
        %v430 = vld [vmem:[#allocation5 + $0x38] sm:$0xff]
        %v431 = vld [vmem:[#allocation5 + $0x40] sm:$0xff]
        %v432 = vld [vmem:[#allocation5 + $0x48] sm:$0xff]
        %v433 = vld [vmem:[#allocation5 + $0x50] sm:$0xff]
        %v434 = vld [vmem:[#allocation5 + $0x58] sm:$0xff]
        %v435 = vld [vmem:[#allocation5 + $0x60] sm:$0xff]
        %v436 = vld [vmem:[#allocation5 + $0x68] sm:$0xff]
        %v437 = vld [vmem:[#allocation5 + $0x70] sm:$0xff]
        %v438 = vld [vmem:[#allocation5 + $0x78] sm:$0xff]
        %v439 = vld [vmem:[#allocation5 + $0x80] sm:$0xff]
        %v440 = vld [vmem:[#allocation5 + $0x88] sm:$0xff]
        %v441 = vld [vmem:[#allocation5 + $0x90] sm:$0xff]
        %v442 = vld [vmem:[#allocation5 + $0x98] sm:$0xff]
        %v443 = vld [vmem:[#allocation5 + $0xa0] sm:$0xff]
        %v444 = vld [vmem:[#allocation5 + $0xa8] sm:$0xff]
        %v445 = vld [vmem:[#allocation5 + $0xb0] sm:$0xff]
        %v446 = vld [vmem:[#allocation5 + $0xb8] sm:$0xff]
        %v447 = vld [vmem:[#allocation5 + $0xc0] sm:$0xff]
        %v448 = vld [vmem:[#allocation5 + $0xc8] sm:$0xff]
        %v449 = vld [vmem:[#allocation5 + $0xd0] sm:$0xff]
        %v450 = vld [vmem:[#allocation5 + $0xd8] sm:$0xff]
        %v451 = vld [vmem:[#allocation5 + $0xe0] sm:$0xff]
        %v452 = vld [vmem:[#allocation5 + $0xe8] sm:$0xff]
        %v453 = vld [vmem:[#allocation5 + $0xf0] sm:$0xff]
        %v454 = vld [vmem:[#allocation5 + $0xf8] sm:$0xff]
        %v455 = vld [vmem:[%s4] sm:$0x1]
        %v457 = vperm.slane %v455, 0
        %459 = vmatpush.msra.mxu0 %v438
        %460 = vmatpush.msra.mxu0 %v437
        %461 = vmatpush.msra.mxu0 %v436
        %462 = vmatpush.msra.mxu0 %v435
        %463 = vmatpush.msra.mxu0 %v434
        %464 = vmatpush.msra.mxu0 %v433
        %465 = vmatpush.msra.mxu0 %v432
        %466 = vmatpush.msra.mxu0 %v431
        %467 = vmatpush.msra.mxu0 %v430
        %468 = vmatpush.msra.mxu0 %v429
        %469 = vmatpush.msra.mxu0 %v428
        %470 = vmatpush.msra.mxu0 %v427
        %471 = vmatpush.msra.mxu0 %v426
        %472 = vmatpush.msra.mxu0 %v425
        %473 = vmatpush.msra.mxu0 %v424
        %474 = vmatpush.msra.mxu0 %v423
        %475 = vmatmul.f32.gmra.mxu0 %v421
        %v476 = vpop.f32.mrf.mxu0
        %v477 = vadd.f32 %v457, %v476
        %478 = vdwg.mxu0
        %479 = vmatpush.msra.mxu0 %v454
        %480 = vmatpush.msra.mxu0 %v453
        %481 = vmatpush.msra.mxu0 %v452
        %482 = vmatpush.msra.mxu0 %v451
        %483 = vmatpush.msra.mxu0 %v450
        %484 = vmatpush.msra.mxu0 %v449
        %485 = vmatpush.msra.mxu0 %v448
        %486 = vmatpush.msra.mxu0 %v447
        %487 = vmatpush.msra.mxu0 %v446
        %488 = vmatpush.msra.mxu0 %v445
        %489 = vmatpush.msra.mxu0 %v444
        %490 = vmatpush.msra.mxu0 %v443
        %491 = vmatpush.msra.mxu0 %v442
        %492 = vmatpush.msra.mxu0 %v441
        %493 = vmatpush.msra.mxu0 %v440
        %494 = vmatpush.msra.mxu0 %v439
        %495 = vmatmul.f32.gmra.mxu0 %v422
        %v496 = vpop.f32.mrf.mxu0
        %v497 = vadd.f32 %v477, %v496
        %498 = vdwg.mxu0
        %v499 = vmax.f32 %v497, 0.0
        %v500 = vld [vmem:[%s5] sm:$0xff]
        %v501 = vld [vmem:[%s5 + $0x8] sm:$0xff]
        %v502 = vld [vmem:[%s5 + $0x10] sm:$0xff]
        %v503 = vld [vmem:[%s5 + $0x18] sm:$0xff]
        %v504 = vld [vmem:[%s5 + $0x20] sm:$0xff]
        %v505 = vld [vmem:[%s5 + $0x28] sm:$0xff]
        %v506 = vld [vmem:[%s5 + $0x30] sm:$0xff]
        %v507 = vld [vmem:[%s5 + $0x38] sm:$0xff]
        %v508 = vld [vmem:[%s5 + $0x40] sm:$0xff]
        %v509 = vld [vmem:[%s5 + $0x48] sm:$0xff]
        %v510 = vld [vmem:[%s5 + $0x50] sm:$0xff]
        %v511 = vld [vmem:[%s5 + $0x58] sm:$0xff]
        %v512 = vld [vmem:[%s5 + $0x60] sm:$0xff]
        %v513 = vld [vmem:[%s5 + $0x68] sm:$0xff]
        %v514 = vld [vmem:[%s5 + $0x70] sm:$0xff]
        %v515 = vld [vmem:[%s5 + $0x78] sm:$0xff]
        %v516 = vld [vmem:[%s6] sm:$0x1]
        %v518 = vperm.slane %v516, 0
        %520 = vmatpush.msra.mxu0 %v515
        %521 = vmatpush.msra.mxu0 %v514
        %522 = vmatpush.msra.mxu0 %v513
        %523 = vmatpush.msra.mxu0 %v512
        %524 = vmatpush.msra.mxu0 %v511
        %525 = vmatpush.msra.mxu0 %v510
        %526 = vmatpush.msra.mxu0 %v509
        %527 = vmatpush.msra.mxu0 %v508
        %528 = vmatpush.msra.mxu0 %v507
        %529 = vmatpush.msra.mxu0 %v506
        %530 = vmatpush.msra.mxu0 %v505
        %531 = vmatpush.msra.mxu0 %v504
        %532 = vmatpush.msra.mxu0 %v503
        %533 = vmatpush.msra.mxu0 %v502
        %534 = vmatpush.msra.mxu0 %v501
        %535 = vmatpush.msra.mxu0 %v500
        %536 = vmatmul.f32.gmra.mxu0 %v499
        %v537 = vpop.f32.mrf.mxu0
        %v538 = vadd.f32 %v518, %v537
        %539 = vdwg.mxu0
        %v540 = vmax.f32 %v538, 0.0
        %v541 = vld [vmem:[%s7] sm:$0xff]
        %v542 = vld [vmem:[%s7 + $0x8] sm:$0xff]
        %v543 = vld [vmem:[%s7 + $0x10] sm:$0xff]
        %v544 = vld [vmem:[%s7 + $0x18] sm:$0xff]
        %v545 = vld [vmem:[%s7 + $0x20] sm:$0xff]
        %v546 = vld [vmem:[%s7 + $0x28] sm:$0xff]
        %v547 = vld [vmem:[%s7 + $0x30] sm:$0xff]
        %v548 = vld [vmem:[%s7 + $0x38] sm:$0xff]
        %v549 = vld [vmem:[%s7 + $0x40] sm:$0xff]
        %v550 = vld [vmem:[%s7 + $0x48] sm:$0xff]
        %v551 = vld [vmem:[%s7 + $0x50] sm:$0xff]
        %v552 = vld [vmem:[%s7 + $0x58] sm:$0xff]
        %v553 = vld [vmem:[%s7 + $0x60] sm:$0xff]
        %v554 = vld [vmem:[%s7 + $0x68] sm:$0xff]
        %v555 = vld [vmem:[%s7 + $0x70] sm:$0xff]
        %v556 = vld [vmem:[%s7 + $0x78] sm:$0xff]
        %v557 = vld [vmem:[%s8] sm:$0x1]
        %v559 = vperm.slane %v557, 0
        %561 = vmatpush.msra.mxu0 %v556
        %562 = vmatpush.msra.mxu0 %v555
        %563 = vmatpush.msra.mxu0 %v554
        %564 = vmatpush.msra.mxu0 %v553
        %565 = vmatpush.msra.mxu0 %v552
        %566 = vmatpush.msra.mxu0 %v551
        %567 = vmatpush.msra.mxu0 %v550
        %568 = vmatpush.msra.mxu0 %v549
        %569 = vmatpush.msra.mxu0 %v548
        %570 = vmatpush.msra.mxu0 %v547
        %571 = vmatpush.msra.mxu0 %v546
        %572 = vmatpush.msra.mxu0 %v545
        %573 = vmatpush.msra.mxu0 %v544
        %574 = vmatpush.msra.mxu0 %v543
        %575 = vmatpush.msra.mxu0 %v542
        %576 = vmatpush.msra.mxu0 %v541
        %577 = vmatmul.f32.gmra.mxu0 %v540
        %v578 = vpop.f32.mrf.mxu0
        %v579 = vadd.f32 %v559, %v578
        %580 = vdwg.mxu0
        %vm581 = vcmask 130048
        %582 = vst.msk [vmem:[%s357] sm:$0xff] %vm581, %v579
        %s583 = sand.u32 %s227, 1
        %s584 = scalar_lea.sflag [#allocation4], %s583
        %s585 = sand.u32 %s227, 1
        %s586 = smul.addr %s585, 8
        %s587 = scalar_lea.vmem [#allocation7], %s586
        // Predicated region
        $region65: #{tpu_custom_call.1} parent=55 // pred_check
          %p588 = pneg %p237
        $region66: #{tpu_custom_call.1} parent=55 // pred_check_branch
          %590 = sbr.rel (%p588) target = $region68
        $region67: #{tpu_custom_call.1} parent=55 // pred_region
          %592 = vsyncadd %s584, 0
          %s593 = smul.addr %s25, 8
          %s594 = scalar_lea.hbm %s9, %s593
          %s596 = sshll.u32 %s587, 4
          %s597 = int_to_ptr.vmem [resolvable:$true] %s596
          %s598 = sshll.u32 %s594, 4
          %s599 = int_to_ptr.hbm [resolvable:$true] %s598
          %601 = dma.vmem_to_hbm [thread:$0]  %s597, 128, %s599, %s584
        $region68: #{tpu_custom_call.1} parent=55 // pred_fallthru
          _
      $region56: #{tpu_custom_call.1} parent=5 // pred_fallthru
        _
      %p602 = scmp.le.s32.totalorder 2, %s20
      // Predicated region
      $region69: #{tpu_custom_call.1} parent=5 // pred_check
        %p603 = pneg %p602
      $region70: #{tpu_custom_call.1} parent=5 // pred_check_branch
        %605 = sbr.rel (%p603) target = $region72
      $region71: #{tpu_custom_call.1} parent=5 // pred_region
        %s606 = ssub.s32 %s20, 2
        // Predicated region
        $region73: #{tpu_custom_call.1} parent=71 // pred_check
          %p607 = pneg %p243
        $region74: #{tpu_custom_call.1} parent=71 // pred_check_branch
          %609 = sbr.rel (%p607) target = $region76
        $region75: #{tpu_custom_call.1} parent=71 // pred_region
          %s610 = sand.u32 %s228, 1
          %s611 = scalar_lea.sflag [#allocation4], %s610
          %s612 = sand.u32 %s228, 1
          %s613 = smul.addr %s612, 8
          %s614 = scalar_lea.vmem [#allocation7], %s613
          %616 = dma.done %s611, 128
        $region76: #{tpu_custom_call.1} parent=71 // pred_fallthru
          _
      $region72: #{tpu_custom_call.1} parent=5 // pred_fallthru
        _
    $region6: #{tpu_custom_call.1} parent=1 // loop_footer
      %s24 = sadd.s32 1, %s20
    $region7: #{tpu_custom_call.1} parent=1 // loop_footer_branch
      %19 = sbr.rel target = $region3
    $region8: #{tpu_custom_call.1} parent=1 // loop_exit
      _
    %617 = vsyncpa [#allocation3], 1
    %s618 = scalar_lea.sflag [#allocation3], 1
    %619 = vsyncpa %s618, 1
    %620 = vsyncpa [#allocation6], 1
    %621 = vsyncpa [#allocation4], 1
    %s622 = scalar_lea.sflag [#allocation4], 1
    %623 = vsyncpa %s622, 1

</llo_original>
